<compile_context>
chip_gen: v7x
topology: tpu7x:2x2x1
jax: 0.10.0
libtpu: 0.0.40
codegen_flags: <defaults>
</compile_context>

<pallas_src>
import math

import jax
import jax.numpy as jnp
from jax.experimental import pallas as pl
from jax.experimental.pallas import tpu as pltpu


# ---------------------------------------------------------------------------
# Pallas kernels (fused MLP over block-diagonal packed bf16 weights)
# ---------------------------------------------------------------------------
def _mlp_kernel(z_ref, w1_ref, b1_ref, w2_ref, b2_ref, o_ref):
    # z_ref : (TB, D) f32   w1_ref : (D, Hp) bf16   b1_ref : (1, Hp) f32
    # w2_ref: (Hp, Op) bf16 b2_ref : (1, Op) f32    o_ref  : (TB, Op) f32
    z_bf = z_ref[...].astype(jnp.bfloat16)
    h = jnp.dot(z_bf, w1_ref[...], preferred_element_type=jnp.float32)
    h = jnp.maximum(h + b1_ref[...], 0.0)                       # bias + ReLU in f32 (VPU)
    # TODO: if Hp grows beyond ~2048, tile the H dim here (fori_loop, unroll=True)
    # instead of materializing the full (TB, Hp) intermediate.
    o = jnp.dot(h.astype(jnp.bfloat16), w2_ref[...], preferred_element_type=jnp.float32)
    o_ref[...] = (o + b2_ref[...]).astype(o_ref.dtype)


def _linear_kernel(z_ref, w_ref, b_ref, o_ref):
    z_bf = z_ref[...].astype(jnp.bfloat16)
    o = jnp.dot(z_bf, w_ref[...], preferred_element_type=jnp.float32)
    o_ref[...] = (o + b_ref[...]).astype(o_ref.dtype)


# ---------------------------------------------------------------------------
# Helpers
# ---------------------------------------------------------------------------
def _round_up(x, m):
    return ((x + m - 1) // m) * m


def _pick_batch_tile(B, max_tile_rows=512):
    """Largest multiple-of-8 tile that divides B (no batch padding needed).

    Prefers >= 2 grid steps so both v7x TensorCores get work.  Falls back to a
    single full-extent tile (always legal) when B is small or not a multiple of 8.
    """
    if B <= 8 or B % 8 != 0:
        return B
    divs = [t for t in range(8, min(B, max_tile_rows) + 1, 8) if B % t == 0]
    if not divs:
        return B
    tb = max(divs)
    if tb == B:
        smaller = [t for t in divs if t < B]
        if smaller:
            tb = max(smaller)           # guarantee >= 2 grid steps when possible
    return tb


def _fused_jnp_forward(z, weights, inter_factor):
    """Tiny-shape fallback: same math as the kernel, plain XLA."""
    if inter_factor == 0:
        W, b = weights
        o = jnp.dot(z.astype(jnp.bfloat16), W, preferred_element_type=jnp.float32) + b
    else:
        W1, b1, W2, b2 = weights
        h = jnp.dot(z.astype(jnp.bfloat16), W1, preferred_element_type=jnp.float32) + b1
        h = jnp.maximum(h, 0.0)
        o = jnp.dot(h.astype(jnp.bfloat16), W2, preferred_element_type=jnp.float32) + b2
    return o.astype(z.dtype)


# ---------------------------------------------------------------------------
# Wrapper
# ---------------------------------------------------------------------------
def area_specific_sti_decoder_forward(z, params, *, force_pallas=False, max_tile_rows=512):
    """z: [B, narea * d_per] -> [B, narea * nbasis * nfactor]."""
    B, D = z.shape
    O = params["narea"] * params["out_per"]          # logical (unpadded) output width

    if params["inter_factor"] == 0:
        weights = (params["W_bd"], params["b_cat"])
        kernel = _linear_kernel
        Hp = 0
    else:
        weights = (params["W1_bd"], params["b1_cat"], params["W2_bd"], params["b2_cat"])
        kernel = _mlp_kernel
        Hp = params["W1_bd"].shape[-1]
    Op = weights[-1].shape[-1]                       # lane-dense padded output width

    # Tiny-shape fast path: fixed custom-call overhead dominates below ~64K elems.
    if not force_pallas and B * D < 65536:
        return _fused_jnp_forward(z, weights, params["inter_factor"])[:, :O]

    TB = _pick_batch_tile(B, max_tile_rows)
    grid = (B // TB,) if B % TB == 0 else (1,)
    if grid == (1,):
        TB = B

    w_specs = [pl.BlockSpec(w.shape, lambda i: (0, 0)) for w in weights]  # resident weights

    # VMEM footprint estimate (double-buffered io tiles + weights + f32 intermediate).
    wbytes = sum(int(w.size) * w.dtype.itemsize for w in weights)
    est = (2 * TB * D * z.dtype.itemsize + 2 * TB * Op * 4
           + 2 * wbytes + TB * max(Hp, Op) * 4)
    vmem_limit = None
    if est > (24 << 20):
        vmem_limit = min(est + (8 << 20), 64 << 20)   # safe on v5e/v6e/v7x

    if params["inter_factor"] == 0:
        flops = 2 * B * D * Op
    else:
        flops = 2 * B * (D * Hp + Hp * Op)
    cost = pl.CostEstimate(
        flops=int(flops),
        transcendentals=0,
        bytes_accessed=int(B * D * z.dtype.itemsize + B * Op * 4 + wbytes),
    )

    out = pl.pallas_call(
        kernel,
        out_shape=jax.ShapeDtypeStruct((B, Op), z.dtype),
        grid=grid,
        in_specs=[pl.BlockSpec((TB, D), lambda i: (i, 0))] + w_specs,
        out_specs=pl.BlockSpec((TB, Op), lambda i: (i, 0)),
        compiler_params=pltpu.CompilerParams(
            dimension_semantics=("parallel",),
            vmem_limit_bytes=vmem_limit,
        ),
        cost_estimate=cost,
    )(z, *weights)

    return out[:, :O] if Op != O else out


# ---------------------------------------------------------------------------
# Parameter init (mirrors torch init), block-diagonal packing + lane padding
# ---------------------------------------------------------------------------
def _kaiming_uniform_relu(key, out_dim, in_dim):
    # kaiming_uniform_(mode='fan_in', nonlinearity='relu'): bound = sqrt(6/fan_in)
    bound = math.sqrt(6.0 / in_dim)
    return jax.random.uniform(key, (out_dim, in_dim), jnp.float32, -bound, bound)


def _linear_default_bias(key, out_dim, in_dim):
    bound = 1.0 / math.sqrt(in_dim)
    return jax.random.uniform(key, (out_dim,), jnp.float32, -bound, bound)


def _block_diag(mats):
    """List of [in_i, out_i] matrices -> block-diagonal [sum(in), sum(out)]."""
    n = len(mats)
    rows = []
    for i, m in enumerate(mats):
        blocks = [m if j == i else jnp.zeros((m.shape[0], mats[j].shape[1]), m.dtype)
                  for j in range(n)]
        rows.append(jnp.concatenate(blocks, axis=1))
    return jnp.concatenate(rows, axis=0)


def _pad_cols(x, to):
    pad = to - x.shape[1]
    return x if pad == 0 else jnp.pad(x, ((0, 0), (0, pad)))


def _pad_rows(x, to):
    pad = to - x.shape[0]
    return x if pad == 0 else jnp.pad(x, ((0, pad), (0, 0)))


def init_params(key, transformer_vae_output_dim, stimulus_decoder_inter_dim_factor,
                stimulus_nbasis, narea, stimulus_nfactor):
    assert transformer_vae_output_dim % narea == 0
    d_per = transformer_vae_output_dim // narea
    out_per = stimulus_nbasis * 1 * stimulus_nfactor       # each sub-decoder has narea=1
    O = narea * out_per
    O_pad = max(128, _round_up(O, 128))                    # lane-dense output width

    params = {"narea": narea, "inter_factor": stimulus_decoder_inter_dim_factor,
              "d_per": d_per, "out_per": out_per}

    if stimulus_decoder_inter_dim_factor == 0:
        Ws, bs = [], []
        for _ in range(narea):
            kw, kb, key = jax.random.split(key, 3)
            W = _kaiming_uniform_relu(kw, out_per, d_per)   # torch [out, in]
            b = _linear_default_bias(kb, out_per, d_per)
            Ws.append(W.T)                                  # -> [in, out]
            bs.append(b)
        # per-area f32 copies kept only for the pure-JAX reference
        params["W_areas"] = jnp.stack(Ws)                   # [narea, d_per, out_per]
        params["b_areas"] = jnp.stack(bs)                   # [narea, out_per]
        W_bd = _pad_cols(_block_diag(Ws), O_pad)            # [D, O_pad]
        params["W_bd"] = W_bd.astype(jnp.bfloat16)
        params["b_cat"] = _pad_cols(jnp.concatenate(bs)[None, :], O_pad)   # [1, O_pad] f32
    else:
        H_per = d_per * stimulus_decoder_inter_dim_factor
        H = narea * H_per
        H_pad = max(128, _round_up(H, 128))
        W1s, b1s, W2s, b2s = [], [], [], []
        for _ in range(narea):
            k1w, k1b, k2w, key = jax.random.split(key, 4)
            W1 = _kaiming_uniform_relu(k1w, H_per, d_per)
            b1 = _linear_default_bias(k1b, H_per, d_per)
            W2 = _kaiming_uniform_relu(k2w, out_per, H_per) * 0.001   # torch: weight *= 0.001
            b2 = jnp.zeros((out_per,), jnp.float32)                   # torch: bias = 0
            W1s.append(W1.T); b1s.append(b1)
            W2s.append(W2.T); b2s.append(b2)
        params["W1_areas"] = jnp.stack(W1s)                 # [narea, d_per, H_per]
        params["b1_areas"] = jnp.stack(b1s)                 # [narea, H_per]
        params["W2_areas"] = jnp.stack(W2s)                 # [narea, H_per, out_per]
        params["b2_areas"] = jnp.stack(b2s)                 # [narea, out_per]
        W1_bd = _pad_cols(_block_diag(W1s), H_pad)                    # [D, H_pad]
        W2_bd = _pad_cols(_pad_rows(_block_diag(W2s), H_pad), O_pad)  # [H_pad, O_pad]
        params["W1_bd"] = W1_bd.astype(jnp.bfloat16)
        params["b1_cat"] = _pad_cols(jnp.concatenate(b1s)[None, :], H_pad)  # zeros in pad -> ReLU(0)=0
        params["W2_bd"] = W2_bd.astype(jnp.bfloat16)
        params["b2_cat"] = _pad_cols(jnp.concatenate(b2s)[None, :], O_pad)
    return params


# ---------------------------------------------------------------------------
# Pure-JAX f32 reference (mirrors the torch forward literally, per-area)
# ---------------------------------------------------------------------------
def reference_forward(z, params):
    narea, d_per = params["narea"], params["d_per"]
    outs = []
    for i in range(narea):
        zi = z[:, i * d_per:(i + 1) * d_per]
        if params["inter_factor"] == 0:
            o = zi @ params["W_areas"][i] + params["b_areas"][i]
        else:
            h = jnp.maximum(zi @ params["W1_areas"][i] + params["b1_areas"][i], 0.0)
            o = h @ params["W2_areas"][i] + params["b2_areas"][i]
        outs.append(o)
    return jnp.concatenate(outs, axis=1)


def _check(out, ref):
    # bf16 weights/activations vs f32 reference: scale-relative tolerance.
    err = float(jnp.max(jnp.abs(out - ref)))
    tol = 5e-2 * float(jnp.max(jnp.abs(ref))) + 1e-5
    assert err <= tol, (err, tol)


# ---------------------------------------------------------------------------
if __name__ == "__main__":
    B = 8
    transformer_vae_output_dim = 32
    narea = 2
    stimulus_decoder_inter_dim_factor = 2
    stimulus_nbasis = 4
    stimulus_nfactor = 3

    key = jax.random.PRNGKey(0)
    kz, kp, kz2 = jax.random.split(key, 3)
    z = jax.random.normal(kz, (B, transformer_vae_output_dim), jnp.float32)

    # MLP path (inter_dim_factor > 0)
    params = init_params(kp, transformer_vae_output_dim,
                         stimulus_decoder_inter_dim_factor,
                         stimulus_nbasis, narea, stimulus_nfactor)
    out = jax.block_until_ready(
        area_specific_sti_decoder_forward(z, params, force_pallas=True))
    assert out.shape == (B, narea * stimulus_nbasis * stimulus_nfactor), out.shape
    _check(out, reference_forward(z, params))

    # Single-Linear path (inter_dim_factor == 0)
    params0 = init_params(kp, transformer_vae_output_dim, 0,
                          stimulus_nbasis, narea, stimulus_nfactor)
    out0 = jax.block_until_ready(
        area_specific_sti_decoder_forward(z, params0, force_pallas=True))
    _check(out0, reference_forward(z, params0))

    # Multi-tile batch (exercises the >=2-step "parallel" grid / megacore path)
    B2 = 64
    z2 = jax.random.normal(kz2, (B2, transformer_vae_output_dim), jnp.float32)
    out2 = jax.block_until_ready(
        area_specific_sti_decoder_forward(z2, params, force_pallas=True))
    assert out2.shape == (B2, narea * stimulus_nbasis * stimulus_nfactor), out2.shape
    _check(out2, reference_forward(z2, params))

    print("KERNEL_OK")
</pallas_src>

<mosaic_0001>
module attributes {stable_mosaic.version = 11 : i64} {
  func.func @_mlp_kernel(%arg0: i32, %arg1: memref<8x32xf32, #tpu.memory_space<vmem>>, %arg2: memref<32x128xbf16, #tpu.memory_space<vmem>>, %arg3: memref<1x128xf32, #tpu.memory_space<vmem>>, %arg4: memref<128x128xbf16, #tpu.memory_space<vmem>>, %arg5: memref<1x128xf32, #tpu.memory_space<vmem>>, %arg6: memref<8x128xf32, #tpu.memory_space<vmem>>) attributes {dimension_semantics = [#tpu.dimension_semantics<parallel>], iteration_bounds = array<i64: 1>, scalar_prefetch = 0 : i64, scratch_operands = 0 : i64, tpu.core_type = #tpu.core_type<tc>, window_params = [{transform_indices = @transform_0, window_bounds = array<i64: 8, 32>}, {pipeline_mode = #tpu.pipeline_mode<synchronous>, transform_indices = @transform_1, window_bounds = array<i64: 32, 128>}, {pipeline_mode = #tpu.pipeline_mode<synchronous>, transform_indices = @transform_2, window_bounds = array<i64: 1, 128>}, {pipeline_mode = #tpu.pipeline_mode<synchronous>, transform_indices = @transform_3, window_bounds = array<i64: 128, 128>}, {pipeline_mode = #tpu.pipeline_mode<synchronous>, transform_indices = @transform_4, window_bounds = array<i64: 1, 128>}, {transform_indices = @transform_5, window_bounds = array<i64: 8, 128>}]} {
    %c0 = arith.constant 0 : index
    %c0_0 = arith.constant 0 : index
    %0 = vector.load %arg1[%c0, %c0_0] : memref<8x32xf32, #tpu.memory_space<vmem>>, vector<8x32xf32>
    %1 = arith.truncf %0 : vector<8x32xf32> to vector<8x32xbf16>
    %c0_1 = arith.constant 0 : index
    %c0_2 = arith.constant 0 : index
    %2 = vector.load %arg2[%c0_1, %c0_2] : memref<32x128xbf16, #tpu.memory_space<vmem>>, vector<32x128xbf16>
    %cst = arith.constant dense<0.000000e+00> : vector<8x128xf32>
    %3 = tpu.matmul %1, %2, %cst {dimension_numbers = #tpu.dot_dimension_numbers<[1], [0], [0], [1], [0, 0, 1, 1], [], []>} : vector<8x32xbf16>, vector<32x128xbf16>, vector<8x128xf32> -> vector<8x128xf32>
    %c0_3 = arith.constant 0 : index
    %c0_4 = arith.constant 0 : index
    %4 = vector.load %arg3[%c0_3, %c0_4] : memref<1x128xf32, #tpu.memory_space<vmem>>, vector<1x128xf32>
    %5 = vector.broadcast %4 : vector<1x128xf32> to vector<8x128xf32>
    %6 = arith.addf %3, %5 : vector<8x128xf32>
    %cst_5 = arith.constant 0.000000e+00 : f32
    %7 = vector.broadcast %cst_5 : f32 to vector<8x128xf32>
    %8 = arith.maximumf %6, %7 : vector<8x128xf32>
    %9 = arith.truncf %8 : vector<8x128xf32> to vector<8x128xbf16>
    %c0_6 = arith.constant 0 : index
    %c0_7 = arith.constant 0 : index
    %10 = vector.load %arg4[%c0_6, %c0_7] : memref<128x128xbf16, #tpu.memory_space<vmem>>, vector<128x128xbf16>
    %cst_8 = arith.constant dense<0.000000e+00> : vector<8x128xf32>
    %11 = tpu.matmul %9, %10, %cst_8 {dimension_numbers = #tpu.dot_dimension_numbers<[1], [0], [0], [1], [0, 0, 1, 1], [], []>} : vector<8x128xbf16>, vector<128x128xbf16>, vector<8x128xf32> -> vector<8x128xf32>
    %c0_9 = arith.constant 0 : index
    %c0_10 = arith.constant 0 : index
    %12 = vector.load %arg5[%c0_9, %c0_10] : memref<1x128xf32, #tpu.memory_space<vmem>>, vector<1x128xf32>
    %13 = vector.broadcast %12 : vector<1x128xf32> to vector<8x128xf32>
    %14 = arith.addf %11, %13 : vector<8x128xf32>
    %c0_11 = arith.constant 0 : index
    %c0_12 = arith.constant 0 : index
    %15 = vector.load %arg6[%c0_11, %c0_12] : memref<8x128xf32, #tpu.memory_space<vmem>>, vector<8x128xf32>
    tpu.vector_store %arg6[%c0_11, %c0_12], %14 {strides = array<i32>} : memref<8x128xf32, #tpu.memory_space<vmem>>, vector<8x128xf32>,
    return
  }
  func.func @transform_0(%arg0: i32) -> (i32, i32) {
    %c0_i32 = arith.constant 0 : i32
    %c0_i32_0 = arith.constant 0 : i32
    return %arg0, %c0_i32 : i32, i32
  }
  func.func @transform_1(%arg0: i32) -> (i32, i32) {
    %c0_i32 = arith.constant 0 : i32
    %c0_i32_0 = arith.constant 0 : i32
    %c0_i32_1 = arith.constant 0 : i32
    return %c0_i32, %c0_i32_0 : i32, i32
  }
  func.func @transform_2(%arg0: i32) -> (i32, i32) {
    %c0_i32 = arith.constant 0 : i32
    %c0_i32_0 = arith.constant 0 : i32
    %c0_i32_1 = arith.constant 0 : i32
    return %c0_i32, %c0_i32_0 : i32, i32
  }
  func.func @transform_3(%arg0: i32) -> (i32, i32) {
    %c0_i32 = arith.constant 0 : i32
    %c0_i32_0 = arith.constant 0 : i32
    %c0_i32_1 = arith.constant 0 : i32
    return %c0_i32, %c0_i32_0 : i32, i32
  }
  func.func @transform_4(%arg0: i32) -> (i32, i32) {
    %c0_i32 = arith.constant 0 : i32
    %c0_i32_0 = arith.constant 0 : i32
    %c0_i32_1 = arith.constant 0 : i32
    return %c0_i32, %c0_i32_0 : i32, i32
  }
  func.func @transform_5(%arg0: i32) -> (i32, i32) {
    %c0_i32 = arith.constant 0 : i32
    %c0_i32_0 = arith.constant 0 : i32
    return %arg0, %c0_i32 : i32, i32
  }
}

</mosaic_0001>

<llo_original>
// kernel: tpu_custom_call.1
$region0: #{tpu_custom_call.1}
  #allocation0 [shape = 'u32[]', space=smem, size = 0x4, offset = 0x4, fixed_abs, tag = 'smem constant byte address 0x4 - core index']
  #allocation1 [shape = 'u32[144,128]{1,0:T(1,128)}', space=vmem, size = 0x12000, scoped, tag = 'internal scratch']
  %s0 = inlined_call_operand.hbm [shape: f32[8,32], index: 0, kind: input, shape index: {}]
  %s1 = inlined_call_operand.hbm [shape: bf16[32,128], index: 1, kind: input, shape index: {}]
  %s2 = inlined_call_operand.vmem [shape: f32[1,128], index: 2, kind: input, shape index: {}]
  %s3 = inlined_call_operand.hbm [shape: bf16[128,128], index: 3, kind: input, shape index: {}]
  %s4 = inlined_call_operand.vmem [shape: f32[1,128], index: 4, kind: input, shape index: {}]
  %s5 = inlined_call_operand.hbm [shape: f32[8,128], index: 5, kind: output, shape index: {}]
  %s6 = sld [smem:[#allocation0]]
  $region42: #{tpu_custom_call.1} parent=0
    _
  %s8 = ssub.s32 1, %s6
  %s9 = scalar_select 0, %s8, %s6
  $region1: #{tpu_custom_call.1} parent=0
    #allocation2 [shape = 'u8[4096]{0}', space=vmem, size = 0x1000, scoped, tag = 'input window, operand 0, single buffered']
    #allocation3 [shape = 's32[1]{0}', space=sflag, size = 0x4, scoped, tag = 'scoped memory for tpu_custom_call.1']
    #allocation4 [shape = 's32[1]{0}', space=sflag, size = 0x4, scoped, tag = 'scoped memory for tpu_custom_call.1']
    #allocation5 [shape = 'u8[8192]{0}', space=vmem, size = 0x2000, scoped, tag = 'input window, operand 1, single buffered']
    #allocation6 [shape = 's32[1]{0}', space=sflag, size = 0x4, scoped, tag = 'scoped memory for tpu_custom_call.1']
    #allocation7 [shape = 'u8[32768]{0}', space=vmem, size = 0x8000, scoped, tag = 'input window, operand 3, single buffered']
    #allocation8 [shape = 'u8[4096]{0}', space=vmem, size = 0x1000, scoped, tag = 'output window, operand 0, single buffered']
    %10 = vsyncpa [#allocation3], 0
    %11 = vsyncpa [#allocation6], 0
    %12 = vsyncpa [#allocation4], 0
    // Predicated region
    $region2: #{tpu_custom_call.1} parent=1 // pred_check
      _
    $region3: #{tpu_custom_call.1} parent=1 // pred_check_branch
      %14 = sbr.rel (0) target = $region5
    $region4: #{tpu_custom_call.1} parent=1 // pred_region
      %s16 = ssub.s32 128, 128
      %17 = vsyncadd [#allocation3], %s16
      %s19 = sshll.u32 [#allocation2], 4
      %s20 = int_to_ptr.vmem [resolvable:$true] %s19
      %22 = dma.hbm_to_vmem [thread:$0]  %s0, 128, %s20, [#allocation3]
    $region5: #{tpu_custom_call.1} parent=1 // pred_fallthru
      _
    // Predicated region
    $region6: #{tpu_custom_call.1} parent=1 // pred_check
      _
    $region7: #{tpu_custom_call.1} parent=1 // pred_check_branch
      %24 = sbr.rel (0) target = $region9
    $region8: #{tpu_custom_call.1} parent=1 // pred_region
      %s26 = ssub.s32 256, 256
      %27 = vsyncadd [#allocation6], %s26
      %s28 = sshll.u32 [#allocation5], 4
      %s29 = int_to_ptr.vmem [resolvable:$true] %s28
      %34 = dma.hbm_to_vmem [thread:$0]  %s1, 256, %s29, [#allocation6], 64, 64, 4
    $region9: #{tpu_custom_call.1} parent=1 // pred_fallthru
      _
    // Predicated region
    $region10: #{tpu_custom_call.1} parent=1 // pred_check
      _
    $region11: #{tpu_custom_call.1} parent=1 // pred_check_branch
      %36 = sbr.rel (0) target = $region13
    $region12: #{tpu_custom_call.1} parent=1 // pred_region
      _
    $region13: #{tpu_custom_call.1} parent=1 // pred_fallthru
      _
    // Predicated region
    $region14: #{tpu_custom_call.1} parent=1 // pred_check
      _
    $region15: #{tpu_custom_call.1} parent=1 // pred_check_branch
      %38 = sbr.rel (0) target = $region17
    $region16: #{tpu_custom_call.1} parent=1 // pred_region
      %s40 = ssub.s32 1024, 1024
      %41 = vsyncadd [#allocation6], %s40
      %s42 = sshll.u32 [#allocation7], 4
      %s43 = int_to_ptr.vmem [resolvable:$true] %s42
      %48 = dma.hbm_to_vmem [thread:$0]  %s3, 1024, %s43, [#allocation6], 64, 64, 4
    $region17: #{tpu_custom_call.1} parent=1 // pred_fallthru
      _
    // Predicated region
    $region18: #{tpu_custom_call.1} parent=1 // pred_check
      _
    $region19: #{tpu_custom_call.1} parent=1 // pred_check_branch
      %50 = sbr.rel (0) target = $region21
    $region20: #{tpu_custom_call.1} parent=1 // pred_region
      _
    $region21: #{tpu_custom_call.1} parent=1 // pred_fallthru
      _
    // Predicated region
    $region22: #{tpu_custom_call.1} parent=1 // pred_check
      _
    $region23: #{tpu_custom_call.1} parent=1 // pred_check_branch
      %52 = sbr.rel (0) target = $region25
    $region24: #{tpu_custom_call.1} parent=1 // pred_region
      %53 = dma.done [#allocation3], 128
    $region25: #{tpu_custom_call.1} parent=1 // pred_fallthru
      _
    // Predicated region
    $region26: #{tpu_custom_call.1} parent=1 // pred_check
      _
    $region27: #{tpu_custom_call.1} parent=1 // pred_check_branch
      %55 = sbr.rel (0) target = $region29
    $region28: #{tpu_custom_call.1} parent=1 // pred_region
      %56 = dma.done [#allocation6], 256
    $region29: #{tpu_custom_call.1} parent=1 // pred_fallthru
      _
    // Predicated region
    $region30: #{tpu_custom_call.1} parent=1 // pred_check
      _
    $region31: #{tpu_custom_call.1} parent=1 // pred_check_branch
      %58 = sbr.rel (0) target = $region33
    $region32: #{tpu_custom_call.1} parent=1 // pred_region
      %59 = dma.done [#allocation6], 1024
    $region33: #{tpu_custom_call.1} parent=1 // pred_fallthru
      _
    %v61 = vld [vmem:[#allocation2] sm:$0xff]
    %v62 = vpack.c.bf16 %v61, %v61
    %v63 = vld [vmem:[#allocation5] sm:$0xf]
    %v64 = vld [vmem:[#allocation5 + $0x4] sm:$0xf]
    %v65 = vld [vmem:[#allocation5 + $0x8] sm:$0xf]
    %v66 = vld [vmem:[#allocation5 + $0xc] sm:$0xf]
    %v67 = vld [vmem:[%s2] sm:$0x1]
    %v69 = vlaneseq
    %v70 = vshrl.u32 %v69, 7
    %v71 = vsub.s32 0, %v70
    %v72 = vrot.slane %v67, %v71
    %v78 = vunpack.c.l.b16 %v63
    %v79 = vunpack.c.l.b16 %v64
    %v80 = vunpack.c.l.b16 %v65
    %v81 = vunpack.c.l.b16 %v66
    %v82 = vpack.c.b16 %v79, %v78
    %v83 = vpack.c.b16 %v81, %v80
    %vm86 = vcmask 261120
    %v88 = vsel %vm86, %v62, 0
    %90 = vmatprep.subr.bf16.mxu0 0
    %91 = vmatpush1.bf16.msra.mxu0 %v82
    %92 = vmatprep.subr.bf16.mxu0 0
    %93 = vmatpush1.bf16.msra.mxu0 %v83
    %94 = vmatprep.subr.bf16.mxu0 0
    %95 = vmatpush1.bf16.msra.mxu0 0
    %96 = vmatprep.subr.bf16.mxu0 0
    %97 = vmatpush1.bf16.msra.mxu0 0
    %98 = vmatprep.subr.bf16.mxu0 0
    %99 = vmatpush1.bf16.msra.mxu0 0
    %100 = vmatprep.subr.bf16.mxu0 0
    %101 = vmatpush1.bf16.msra.mxu0 0
    %102 = vmatprep.subr.bf16.mxu0 0
    %103 = vmatpush1.bf16.msra.mxu0 0
    %104 = vmatprep.subr.bf16.mxu0 0
    %105 = vmatpush1.bf16.msra.mxu0 0
    %106 = vmatprep.subr.bf16.mxu0 0
    %107 = vmatpush1.bf16.msra.mxu0 0
    %108 = vmatprep.subr.bf16.mxu0 0
    %109 = vmatpush1.bf16.msra.mxu0 0
    %110 = vmatprep.subr.bf16.mxu0 0
    %111 = vmatpush1.bf16.msra.mxu0 0
    %112 = vmatprep.subr.bf16.mxu0 0
    %113 = vmatpush1.bf16.msra.mxu0 0
    %114 = vmatprep.subr.bf16.mxu0 0
    %115 = vmatpush1.bf16.msra.mxu0 0
    %116 = vmatprep.subr.bf16.mxu0 0
    %117 = vmatpush1.bf16.msra.mxu0 0
    %118 = vmatprep.subr.bf16.mxu0 0
    %119 = vmatpush1.bf16.msra.mxu0 0
    %120 = vmatprep.subr.bf16.mxu0 0
    %121 = vmatpush1.bf16.msra.mxu0 0
    %122 = vmatprep.mubr.bf16.mxu0 0
    %123 = vmatmul.mubr.bf16.gmra.mrb[0].mxu0 %v88
    %v124 = vpop.f32.mrb[0].mxu0
    %v125 = vadd.f32 %v72, %v124
    %v126 = vpop.f32.mrb[0].mxu0
    %v127 = vpop.f32.mrb[0].mxu0
    %v128 = vpop.f32.mrb[0].mxu0
    %129 = vdwg.mxu0
    %v130 = vmax.f32 %v125, 0.0
    %v131 = vpack.c.bf16 %v130, %v130
    %v132 = vld [vmem:[#allocation7] sm:$0xf]
    %v133 = vld [vmem:[#allocation7 + $0x4] sm:$0xf]
    %v134 = vld [vmem:[#allocation7 + $0x8] sm:$0xf]
    %v135 = vld [vmem:[#allocation7 + $0xc] sm:$0xf]
    %v136 = vld [vmem:[#allocation7 + $0x10] sm:$0xf]
    %v137 = vld [vmem:[#allocation7 + $0x14] sm:$0xf]
    %v138 = vld [vmem:[#allocation7 + $0x18] sm:$0xf]
    %v139 = vld [vmem:[#allocation7 + $0x1c] sm:$0xf]
    %v140 = vld [vmem:[#allocation7 + $0x20] sm:$0xf]
    %v141 = vld [vmem:[#allocation7 + $0x24] sm:$0xf]
    %v142 = vld [vmem:[#allocation7 + $0x28] sm:$0xf]
    %v143 = vld [vmem:[#allocation7 + $0x2c] sm:$0xf]
    %v144 = vld [vmem:[#allocation7 + $0x30] sm:$0xf]
    %v145 = vld [vmem:[#allocation7 + $0x34] sm:$0xf]
    %v146 = vld [vmem:[#allocation7 + $0x38] sm:$0xf]
    %v147 = vld [vmem:[#allocation7 + $0x3c] sm:$0xf]
    %v148 = vld [vmem:[%s4] sm:$0x1]
    %v150 = vlaneseq
    %v151 = vshrl.u32 %v150, 7
    %v152 = vsub.s32 0, %v151
    %v153 = vrot.slane %v148, %v152
    %v171 = vunpack.c.l.b16 %v132
    %v172 = vunpack.c.l.b16 %v133
    %v173 = vunpack.c.l.b16 %v134
    %v174 = vunpack.c.l.b16 %v135
    %v175 = vunpack.c.l.b16 %v136
    %v176 = vunpack.c.l.b16 %v137
    %v177 = vunpack.c.l.b16 %v138
    %v178 = vunpack.c.l.b16 %v139
    %v179 = vunpack.c.l.b16 %v140
    %v180 = vunpack.c.l.b16 %v141
    %v181 = vunpack.c.l.b16 %v142
    %v182 = vunpack.c.l.b16 %v143
    %v183 = vunpack.c.l.b16 %v144
    %v184 = vunpack.c.l.b16 %v145
    %v185 = vunpack.c.l.b16 %v146
    %v186 = vunpack.c.l.b16 %v147
    %v187 = vpack.c.b16 %v172, %v171
    %v188 = vpack.c.b16 %v174, %v173
    %v189 = vpack.c.b16 %v176, %v175
    %v190 = vpack.c.b16 %v178, %v177
    %v191 = vpack.c.b16 %v180, %v179
    %v192 = vpack.c.b16 %v182, %v181
    %v193 = vpack.c.b16 %v184, %v183
    %v194 = vpack.c.b16 %v186, %v185
    %203 = vmatprep.subr.bf16.mxu0 0
    %204 = vmatpush1.bf16.msra.mxu0 %v187
    %205 = vmatprep.subr.bf16.mxu0 0
    %206 = vmatpush1.bf16.msra.mxu0 %v188
    %207 = vmatprep.subr.bf16.mxu0 0
    %208 = vmatpush1.bf16.msra.mxu0 %v189
    %209 = vmatprep.subr.bf16.mxu0 0
    %210 = vmatpush1.bf16.msra.mxu0 %v190
    %211 = vmatprep.subr.bf16.mxu0 0
    %212 = vmatpush1.bf16.msra.mxu0 %v191
    %213 = vmatprep.subr.bf16.mxu0 0
    %214 = vmatpush1.bf16.msra.mxu0 %v192
    %215 = vmatprep.subr.bf16.mxu0 0
    %216 = vmatpush1.bf16.msra.mxu0 %v193
    %217 = vmatprep.subr.bf16.mxu0 0
    %218 = vmatpush1.bf16.msra.mxu0 %v194
    %219 = vmatprep.subr.bf16.mxu0 0
    %220 = vmatpush1.bf16.msra.mxu0 0
    %221 = vmatprep.subr.bf16.mxu0 0
    %222 = vmatpush1.bf16.msra.mxu0 0
    %223 = vmatprep.subr.bf16.mxu0 0
    %224 = vmatpush1.bf16.msra.mxu0 0
    %225 = vmatprep.subr.bf16.mxu0 0
    %226 = vmatpush1.bf16.msra.mxu0 0
    %227 = vmatprep.subr.bf16.mxu0 0
    %228 = vmatpush1.bf16.msra.mxu0 0
    %229 = vmatprep.subr.bf16.mxu0 0
    %230 = vmatpush1.bf16.msra.mxu0 0
    %231 = vmatprep.subr.bf16.mxu0 0
    %232 = vmatpush1.bf16.msra.mxu0 0
    %233 = vmatprep.subr.bf16.mxu0 0
    %234 = vmatpush1.bf16.msra.mxu0 0
    %235 = vmatprep.mubr.bf16.mxu0 0
    %236 = vmatmul.mubr.bf16.gmra.mrb[0].mxu0 %v131
    %v237 = vpop.f32.mrb[0].mxu0
    %v238 = vadd.f32 %v153, %v237
    %v239 = vpop.f32.mrb[0].mxu0
    %v240 = vpop.f32.mrb[0].mxu0
    %v241 = vpop.f32.mrb[0].mxu0
    %242 = vdwg.mxu0
    %243 = vst [vmem:[#allocation8] sm:$0xff] %v238
    // Predicated region
    $region34: #{tpu_custom_call.1} parent=1 // pred_check
      _
    $region35: #{tpu_custom_call.1} parent=1 // pred_check_branch
      %245 = sbr.rel (0) target = $region37
    $region36: #{tpu_custom_call.1} parent=1 // pred_region
      %s247 = ssub.s32 128, 128
      %248 = vsyncadd [#allocation4], %s247
      %s250 = sshll.u32 [#allocation8], 4
      %s251 = int_to_ptr.vmem [resolvable:$true] %s250
      %253 = dma.vmem_to_hbm [thread:$0]  %s251, 128, %s5, [#allocation4]
    $region37: #{tpu_custom_call.1} parent=1 // pred_fallthru
      _
    // Predicated region
    $region38: #{tpu_custom_call.1} parent=1 // pred_check
      _
    $region39: #{tpu_custom_call.1} parent=1 // pred_check_branch
      %255 = sbr.rel (0) target = $region41
    $region40: #{tpu_custom_call.1} parent=1 // pred_region
      %256 = dma.done [#allocation4], 128
    $region41: #{tpu_custom_call.1} parent=1 // pred_fallthru
      _
    %257 = vsyncpa [#allocation3], 1
    %258 = vsyncpa [#allocation6], 1
    %259 = vsyncpa [#allocation4], 1

</llo_original>
